<compile_context>
chip_gen: v7x
topology: tpu7x:2x2x1
jax: 0.10.0
libtpu: 0.0.40
codegen_flags: <defaults>
</compile_context>

<pallas_src>
import functools

import jax
import jax.numpy as jnp
from jax.experimental import pallas as pl
from jax.experimental.pallas import tpu as pltpu


# --------------------------------------------------------------------------- pe table
def make_pe_table(d_model: int, max_len: int) -> jnp.ndarray:
    """Sinusoidal table, identical math to the torch __init__ (float32, [max_len, d_model])."""
    assert d_model % 2 == 0, "PositionalEncoding expects an even d_model"
    position = jnp.arange(0, max_len, dtype=jnp.float32)[:, None]            # [max_len, 1]
    div_term = jnp.exp(
        jnp.arange(0, d_model, 2, dtype=jnp.float32)
        * (-jnp.log(jnp.float32(10000.0)) / d_model)
    )                                                                         # [d_model//2]
    ang = position * div_term                                                 # [max_len, d_model//2]
    pe = jnp.zeros((max_len, d_model), dtype=jnp.float32)
    pe = pe.at[:, 0::2].set(jnp.sin(ang))
    pe = pe.at[:, 1::2].set(jnp.cos(ang))
    return pe


# --------------------------------------------------------------------------- kernels
def _add_bcast_kernel(x_ref, pe_ref, o_ref):
    # x_ref/o_ref: (tile_s, tile_b, d_model); pe_ref: (tile_s, d_model).
    # Sublane broadcast over batch is VPU/XLU work hidden under the DMA stream.
    o_ref[...] = x_ref[...] + pe_ref[...][:, None, :]


def _add_flat_kernel(reps: int, x_ref, pe_ref, o_ref):
    # x_ref/o_ref: (tile_s, reps * d_model); pe_ref: (tile_s, d_model).
    pe = pe_ref[...]
    if reps > 1:
        pe = jnp.tile(pe, (1, reps))   # in-kernel lane replication; no HBM-side pe tiling
    o_ref[...] = x_ref[...] + pe


# --------------------------------------------------------------------------- tiling helpers
def _round_up(n: int, m: int) -> int:
    return ((n + m - 1) // m) * m


def _pick_seq_tile(seq_len: int, row_bytes: int, target_bytes: int,
                   ensure_two_steps: bool = False) -> int:
    """Seq tile: multiple of 8 (or full seq), ~target_bytes of block data per step."""
    if seq_len <= 8:
        return seq_len
    t = max(8, (target_bytes // max(row_bytes, 1)) // 8 * 8)
    if ensure_two_steps:
        # v7x megacore: parallel grid axes are sharded across its 2 TensorCores,
        # so keep >= 2 grid steps whenever seq allows it.
        t = min(t, _round_up(pl.cdiv(seq_len, 2), 8))
    if t >= seq_len:
        return seq_len
    return int(t)


def _vmem_hard_cap() -> int:
    """Scoped-VMEM request ceiling: half of physical VMEM, never more than 48 MiB
    (=> ~32 MiB on v7x's 64 MiB VMEM, 48 MiB on v5e/v6e's 128 MiB)."""
    phys = 64 << 20  # conservative default (v7x per-TC VMEM)
    try:
        phys = int(pltpu.get_tpu_info().vmem_capacity_bytes)
    except Exception:
        pass
    return int(min(48 << 20, phys // 2))


def _vmem_limit(need_bytes: int, hard_cap: int) -> int:
    # need_bytes already covers the double-buffered blocks; 1.5x headroom for Mosaic scratch.
    return int(min(max(int(need_bytes * 1.5), 8 << 20), hard_cap))


# --------------------------------------------------------------------------- pallas paths
def _pe_add_3d(x, pe, out_dtype, target_block_bytes, hard_cap, donate_x):
    """Native [seq, batch, d_model] layout (no wrapper transposes); pe broadcast in-kernel."""
    seq_len, batch, d_model = x.shape
    isz = jnp.dtype(x.dtype).itemsize + jnp.dtype(out_dtype).itemsize

    # Batch tile: full batch (block dim == full array dim satisfies the (8,128) rule);
    # split in multiples of 8 only if even an 8-row seq slab blows the block budget.
    tile_b = batch
    if batch > 8 and 8 * batch * d_model * isz > target_block_bytes:
        tile_b = max(8, (target_block_bytes // (8 * d_model * isz)) // 8 * 8)
        tile_b = min(tile_b, batch)
    n_b = pl.cdiv(batch, tile_b)

    tile_s = _pick_seq_tile(seq_len, tile_b * d_model * isz, target_block_bytes,
                            ensure_two_steps=(n_b == 1))
    n_s = pl.cdiv(seq_len, tile_s)

    need = 2 * (tile_s * tile_b * d_model * isz + tile_s * d_model * 4)  # double-buffered
    vmem_limit = _vmem_limit(need, hard_cap)

    alias = {0: 0} if (donate_x and out_dtype == x.dtype) else {}

    return pl.pallas_call(
        _add_bcast_kernel,
        out_shape=jax.ShapeDtypeStruct((seq_len, batch, d_model), out_dtype),
        grid=(n_s, n_b),                       # batch fastest -> pe block reused per batch step
        in_specs=[
            pl.BlockSpec((tile_s, tile_b, d_model), lambda i, b: (i, b, 0)),
            pl.BlockSpec((tile_s, d_model), lambda i, b: (i, 0)),
        ],
        out_specs=pl.BlockSpec((tile_s, tile_b, d_model), lambda i, b: (i, b, 0)),
        compiler_params=pltpu.CompilerParams(
            dimension_semantics=("parallel", "parallel"),
            vmem_limit_bytes=vmem_limit,
        ),
        input_output_aliases=alias,
    )(x, pe)


def _pe_add_flat(x, pe, out_dtype, target_block_bytes, hard_cap, donate_x):
    """d_model not a 128-multiple: free reshape to [seq, batch*d_model] for lane-dense stores.
    pe stays [seq, d_model] in HBM; it is replicated across batch inside the kernel."""
    seq_len, batch, d_model = x.shape
    isz = jnp.dtype(x.dtype).itemsize + jnp.dtype(out_dtype).itemsize
    lanes = batch * d_model

    x2 = x.reshape(seq_len, lanes)             # free for the default contiguous layout

    tile_s = _pick_seq_tile(seq_len, lanes * isz, target_block_bytes, ensure_two_steps=True)
    n_s = pl.cdiv(seq_len, tile_s)

    need = 2 * (tile_s * lanes * isz + tile_s * d_model * 4)
    vmem_limit = _vmem_limit(need, hard_cap)

    alias = {0: 0} if (donate_x and out_dtype == x.dtype) else {}

    out2 = pl.pallas_call(
        functools.partial(_add_flat_kernel, batch),
        out_shape=jax.ShapeDtypeStruct((seq_len, lanes), out_dtype),
        grid=(n_s,),
        in_specs=[
            pl.BlockSpec((tile_s, lanes), lambda i: (i, 0)),
            pl.BlockSpec((tile_s, d_model), lambda i: (i, 0)),
        ],
        out_specs=pl.BlockSpec((tile_s, lanes), lambda i: (i, 0)),
        compiler_params=pltpu.CompilerParams(
            dimension_semantics=("parallel",),
            vmem_limit_bytes=vmem_limit,
        ),
        input_output_aliases=alias,
    )(x2, pe)
    return out2.reshape(seq_len, batch, d_model)


# --------------------------------------------------------------------------- entry point
_MIN_PALLAS_BYTES = 1 << 20  # below ~1 MiB pallas_call overhead dominates a fused XLA add


def positional_encoding(
    x: jnp.ndarray,
    pe_table: jnp.ndarray,
    *,
    target_block_bytes: int = 4 << 20,
    allow_xla_fallback: bool = True,
    donate_x: bool = False,
) -> jnp.ndarray:
    """x: [seq_len, batch, d_model]; returns x + pe_table[:seq_len] broadcast over batch."""
    seq_len, batch, d_model = x.shape
    if seq_len > pe_table.shape[0]:
        raise ValueError(f"seq_len={seq_len} exceeds max_len={pe_table.shape[0]}")
    if d_model != pe_table.shape[1]:
        raise ValueError(f"d_model={d_model} does not match pe table width {pe_table.shape[1]}")

    # Keep the torch buffer dtype (f32) so half-precision x promotes exactly like `x + self.pe`.
    pe = pe_table[:seq_len].astype(jnp.float32)
    out_dtype = jnp.result_type(x.dtype, pe.dtype)

    if allow_xla_fallback and x.size * jnp.dtype(x.dtype).itemsize < _MIN_PALLAS_BYTES:
        # Guarded fallback: at tiny sizes a fused XLA add beats any pallas_call.
        return x.astype(out_dtype) + pe[:, None, :]

    hard_cap = _vmem_hard_cap()
    # Clamp the per-block budget so ~6 double-buffered blocks + compiler scratch fit the cap.
    target = int(min(target_block_bytes, max(hard_cap // 8, 512 << 10)))

    if d_model % 128 == 0:
        return _pe_add_3d(x, pe, out_dtype, target, hard_cap, donate_x)

    isz = jnp.dtype(x.dtype).itemsize + jnp.dtype(out_dtype).itemsize
    if 8 * batch * d_model * isz <= target:
        return _pe_add_flat(x, pe, out_dtype, target, hard_cap, donate_x)
    # Huge batch*d_model with a non-128 d_model: 3-D path is still correct
    # (just not fully lane-dense); avoids blowing the block budget.
    return _pe_add_3d(x, pe, out_dtype, target, hard_cap, donate_x)


# --------------------------------------------------------------------------- demo / check
if __name__ == "__main__":
    key = jax.random.PRNGKey(0)
    k1, k2 = jax.random.split(key)

    # Case 1: module-consistent small shape (seq=8, batch=2, d_model=32) -> flat-lane path.
    seq1, b1, dm1, ml1 = 8, 2, 32, 64
    x1 = jax.random.normal(k1, (seq1, b1, dm1), dtype=jnp.float32)
    pe1 = make_pe_table(dm1, ml1)
    out1 = jax.block_until_ready(positional_encoding(x1, pe1, allow_xla_fallback=False))
    ref1 = x1 + pe1[:seq1][:, None, :]
    assert out1.shape == (seq1, b1, dm1)
    assert jnp.allclose(out1, ref1, atol=1e-6), "mismatch vs reference (flat path)"

    # Case 2: 128-multiple d_model -> native-layout 3-D path with a multi-step seq grid
    # (seq=72 is not a tile multiple, so the last tile exercises Pallas edge masking).
    seq2, b2, dm2, ml2 = 72, 2, 128, 128
    x2 = jax.random.normal(k2, (seq2, b2, dm2), dtype=jnp.float32)
    pe2 = make_pe_table(dm2, ml2)
    out2 = jax.block_until_ready(positional_encoding(x2, pe2, allow_xla_fallback=False))
    ref2 = x2 + pe2[:seq2][:, None, :]
    assert out2.shape == (seq2, b2, dm2)
    assert jnp.allclose(out2, ref2, atol=1e-6), "mismatch vs reference (3-D path)"

    print("KERNEL_OK")
</pallas_src>

<mosaic_0001>
module attributes {stable_mosaic.version = 11 : i64} {
  func.func @_add_flat_kernel(%arg0: i32, %arg1: memref<8x64xf32, #tpu.memory_space<vmem>>, %arg2: memref<8x32xf32, #tpu.memory_space<vmem>>, %arg3: memref<8x64xf32, #tpu.memory_space<vmem>>) attributes {dimension_semantics = [#tpu.dimension_semantics<parallel>], iteration_bounds = array<i64: 1>, scalar_prefetch = 0 : i64, scratch_operands = 0 : i64, tpu.core_type = #tpu.core_type<tc>, window_params = [{transform_indices = @transform_0, window_bounds = array<i64: 8, 64>}, {transform_indices = @transform_1, window_bounds = array<i64: 8, 32>}, {transform_indices = @transform_2, window_bounds = array<i64: 8, 64>}]} {
    %c0 = arith.constant 0 : index
    %c0_0 = arith.constant 0 : index
    %0 = vector.load %arg2[%c0, %c0_0] : memref<8x32xf32, #tpu.memory_space<vmem>>, vector<8x32xf32>
    %1 = tpu.concatenate %0, %0 in 1 : vector<8x32xf32>, vector<8x32xf32> -> vector<8x64xf32>
    %c0_1 = arith.constant 0 : index
    %c0_2 = arith.constant 0 : index
    %2 = vector.load %arg1[%c0_1, %c0_2] : memref<8x64xf32, #tpu.memory_space<vmem>>, vector<8x64xf32>
    %3 = arith.addf %2, %1 : vector<8x64xf32>
    %c0_3 = arith.constant 0 : index
    %c0_4 = arith.constant 0 : index
    %4 = vector.load %arg3[%c0_3, %c0_4] : memref<8x64xf32, #tpu.memory_space<vmem>>, vector<8x64xf32>
    tpu.vector_store %arg3[%c0_3, %c0_4], %3 {strides = array<i32>} : memref<8x64xf32, #tpu.memory_space<vmem>>, vector<8x64xf32>,
    return
  }
  func.func @transform_0(%arg0: i32) -> (i32, i32) {
    %c0_i32 = arith.constant 0 : i32
    %c0_i32_0 = arith.constant 0 : i32
    return %arg0, %c0_i32 : i32, i32
  }
  func.func @transform_1(%arg0: i32) -> (i32, i32) {
    %c0_i32 = arith.constant 0 : i32
    %c0_i32_0 = arith.constant 0 : i32
    return %arg0, %c0_i32 : i32, i32
  }
  func.func @transform_2(%arg0: i32) -> (i32, i32) {
    %c0_i32 = arith.constant 0 : i32
    %c0_i32_0 = arith.constant 0 : i32
    return %arg0, %c0_i32 : i32, i32
  }
}

</mosaic_0001>

<llo_original>
// kernel: tpu_custom_call.1
$region0: #{tpu_custom_call.1}
  #allocation0 [shape = 'u32[]', space=smem, size = 0x4, offset = 0x4, fixed_abs, tag = 'smem constant byte address 0x4 - core index']
  #allocation1 [shape = 'u32[144,128]{1,0:T(1,128)}', space=vmem, size = 0x12000, scoped, tag = 'internal scratch']
  %s0 = inlined_call_operand.hbm [shape: f32[8,64], index: 0, kind: input, shape index: {}]
  %s1 = inlined_call_operand.hbm [shape: f32[8,32], index: 1, kind: input, shape index: {}]
  %s2 = inlined_call_operand.hbm [shape: f32[8,64], index: 2, kind: output, shape index: {}]
  %s3 = sld [smem:[#allocation0]]
  $region26: #{tpu_custom_call.1} parent=0
    _
  %s5 = ssub.s32 1, %s3
  %s6 = scalar_select 0, %s5, %s3
  $region1: #{tpu_custom_call.1} parent=0
    #allocation2 [shape = 'u8[4096]{0}', space=vmem, size = 0x1000, scoped, tag = 'input window, operand 0, single buffered']
    #allocation3 [shape = 's32[1]{0}', space=sflag, size = 0x4, scoped, tag = 'scoped memory for tpu_custom_call.1']
    #allocation4 [shape = 's32[1]{0}', space=sflag, size = 0x4, scoped, tag = 'scoped memory for tpu_custom_call.1']
    #allocation5 [shape = 'u8[4096]{0}', space=vmem, size = 0x1000, scoped, tag = 'input window, operand 1, single buffered']
    #allocation6 [shape = 's32[1]{0}', space=sflag, size = 0x4, scoped, tag = 'scoped memory for tpu_custom_call.1']
    #allocation7 [shape = 'u8[4096]{0}', space=vmem, size = 0x1000, scoped, tag = 'output window, operand 0, single buffered']
    %7 = vsyncpa [#allocation3], 0
    %8 = vsyncpa [#allocation6], 0
    %9 = vsyncpa [#allocation4], 0
    // Predicated region
    $region2: #{tpu_custom_call.1} parent=1 // pred_check
      _
    $region3: #{tpu_custom_call.1} parent=1 // pred_check_branch
      %11 = sbr.rel (0) target = $region5
    $region4: #{tpu_custom_call.1} parent=1 // pred_region
      %s13 = ssub.s32 128, 128
      %14 = vsyncadd [#allocation3], %s13
      %s16 = sshll.u32 [#allocation2], 4
      %s17 = int_to_ptr.vmem [resolvable:$true] %s16
      %19 = dma.hbm_to_vmem [thread:$0]  %s0, 128, %s17, [#allocation3]
    $region5: #{tpu_custom_call.1} parent=1 // pred_fallthru
      _
    // Predicated region
    $region6: #{tpu_custom_call.1} parent=1 // pred_check
      _
    $region7: #{tpu_custom_call.1} parent=1 // pred_check_branch
      %21 = sbr.rel (0) target = $region9
    $region8: #{tpu_custom_call.1} parent=1 // pred_region
      %s23 = ssub.s32 128, 128
      %24 = vsyncadd [#allocation6], %s23
      %s26 = sshll.u32 [#allocation5], 4
      %s27 = int_to_ptr.vmem [resolvable:$true] %s26
      %29 = dma.hbm_to_vmem [thread:$0]  %s1, 128, %s27, [#allocation6]
    $region9: #{tpu_custom_call.1} parent=1 // pred_fallthru
      _
    // Predicated region
    $region10: #{tpu_custom_call.1} parent=1 // pred_check
      _
    $region11: #{tpu_custom_call.1} parent=1 // pred_check_branch
      %31 = sbr.rel (0) target = $region13
    $region12: #{tpu_custom_call.1} parent=1 // pred_region
      %32 = dma.done [#allocation3], 128
    $region13: #{tpu_custom_call.1} parent=1 // pred_fallthru
      _
    // Predicated region
    $region14: #{tpu_custom_call.1} parent=1 // pred_check
      _
    $region15: #{tpu_custom_call.1} parent=1 // pred_check_branch
      %34 = sbr.rel (0) target = $region17
    $region16: #{tpu_custom_call.1} parent=1 // pred_region
      %35 = dma.done [#allocation6], 128
    $region17: #{tpu_custom_call.1} parent=1 // pred_fallthru
      _
    %v36 = vld [vmem:[#allocation5] sm:$0xff]
    %38 = vrot.lane.b32.xlu0 %v36, 32
    %v39 = vpop.permute.xlu0 %38
    %vm41 = vcmask 261120
    %v42 = vsel %vm41, %v36, %v39
    %v43 = vld [vmem:[#allocation2] sm:$0xff]
    %v44 = vadd.f32 %v43, %v42
    %vm45 = vcmask 523264
    %46 = vst.msk [vmem:[#allocation7] sm:$0xff] %vm45, %v44
    // Predicated region
    $region18: #{tpu_custom_call.1} parent=1 // pred_check
      _
    $region19: #{tpu_custom_call.1} parent=1 // pred_check_branch
      %48 = sbr.rel (0) target = $region21
    $region20: #{tpu_custom_call.1} parent=1 // pred_region
      %s50 = ssub.s32 128, 128
      %51 = vsyncadd [#allocation4], %s50
      %s53 = sshll.u32 [#allocation7], 4
      %s54 = int_to_ptr.vmem [resolvable:$true] %s53
      %56 = dma.vmem_to_hbm [thread:$0]  %s54, 128, %s2, [#allocation4]
    $region21: #{tpu_custom_call.1} parent=1 // pred_fallthru
      _
    // Predicated region
    $region22: #{tpu_custom_call.1} parent=1 // pred_check
      _
    $region23: #{tpu_custom_call.1} parent=1 // pred_check_branch
      %58 = sbr.rel (0) target = $region25
    $region24: #{tpu_custom_call.1} parent=1 // pred_region
      %59 = dma.done [#allocation4], 128
    $region25: #{tpu_custom_call.1} parent=1 // pred_fallthru
      _
    %60 = vsyncpa [#allocation3], 1
    %61 = vsyncpa [#allocation6], 1
    %62 = vsyncpa [#allocation4], 1

</llo_original>
